<compile_context>
chip_gen: v7x
topology: tpu7x:2x2x1
jax: 0.10.0
libtpu: 0.0.40
codegen_flags: <defaults>
</compile_context>

<pallas_src>
import functools

import jax
import jax.numpy as jnp
from jax.experimental import pallas as pl
from jax.experimental.pallas import tpu as pltpu

PAIRWISE_EPS = 1e-6   # F.pairwise_distance default eps (added to the difference)

# Leading "parallel" grid axis size. 2 engages both TensorCores on v7x; on
# single-TC chips (v5e/v6e) the extra axis is just serialized and harmless.
_NUM_CORES = 2


def _contrastive_loss_kernel(x1_ref, x2_ref, label_ref, out_ref, *,
                             margin, batch, tiles_per_core, tile_rows):
    c = pl.program_id(0)   # TensorCore slot (parallel axis)
    t = pl.program_id(1)   # batch-tile index within this core (arbitrary axis)

    @pl.when(t == 0)
    def _init():
        out_ref[...] = jnp.zeros_like(out_ref)

    # Cast in-kernel (VPU) so HBM traffic stays at the native dtype.
    x1 = x1_ref[...].astype(jnp.float32)                         # (tb, D)
    x2 = x2_ref[...].astype(jnp.float32)                         # (tb, D)

    diff = x1 - x2 + PAIRWISE_EPS                                 # eps on the difference
    # TODO(synk): if a bundle dump shows the XLU lane reduction binding (bf16 on
    # v6e/v7x), push this row-sum through the idle MXU instead:
    #   jnp.dot(diff*diff, jnp.ones((D,1), jnp.float32), precision=HIGHEST)
    sq_sum = jnp.sum(diff * diff, axis=-1, keepdims=True)         # (tb, 1)
    d = jnp.sqrt(sq_sum)                                          # euclidean distance
    d2 = d * d                                                    # .pow(2) after sqrt, like torch

    lbl = label_ref[...].astype(jnp.float32)                      # (tb, 1)
    hinge = jnp.maximum(margin - d, 0.0)                          # clamp(margin - d, min=0)
    loss = lbl * d2 + (1.0 - lbl) * hinge * hinge                 # (tb, 1)

    # Mask rows past the true batch size: partial tail tile, and tiles whose
    # block index was clamped in the index_map (entire tile out of range).
    g = c * tiles_per_core + t                                    # global tile index (unclamped)
    row = jax.lax.broadcasted_iota(jnp.int32, (tile_rows, 1), 0) + g * tile_rows
    loss = jnp.where(row < batch, loss, 0.0)                      # select, not multiply

    # Accumulate this tile's partial sum; broadcast over the lane-aligned
    # (1,8,128) output block (every element of core c's block holds partial_c).
    out_ref[...] += jnp.sum(loss)


def _vmem_budget():
    """Generation-aware (tile_budget_bytes, vmem_limit_bytes)."""
    cap = None
    try:
        cap = getattr(pltpu.get_tpu_info(), "vmem_capacity_bytes", None)
    except Exception:
        cap = None
    if not cap:
        cap = 64 * 1024 * 1024            # conservative: v7x per-TC VMEM
    cap = int(cap)
    tile_budget = min(int(cap * 0.70), 64 * 1024 * 1024)    # 64 MiB on v5e/v6e, ~45 MiB on v7x
    vmem_limit = min(int(cap * 0.85), 100 * 1024 * 1024)    # explicit limit with headroom
    return tile_budget, vmem_limit


def _choose_tile(batch, dim, itemsize, budget_bytes, num_cores):
    """Largest sublane-aligned batch tile that fits the per-core VMEM budget.

    Per-row accounting (review fix: include f32 intermediates + label blocks):
      2 inputs x 2 pipeline buffers at native dtype        -> 4*dim*itemsize
      ~4 live f32 (tb, D) intermediates (x1f,x2f,diff,sq)  -> 16*dim
      label block lane-padded to 128, double-buffered      -> 2*128*4
    """
    per_row = 4 * dim * itemsize + 4 * dim * 4 + 2 * 128 * 4
    tb = budget_bytes // max(per_row, 1)
    tb = min(tb, 8192)                      # past ~8K rows the 0.35us/step overhead is amortized
    per_core = -(-batch // num_cores)       # keep every core busy
    tb = min(tb, -(-per_core // 8) * 8)
    tb = max((tb // 8) * 8, 8)
    if tb >= batch:
        return batch                        # single tile: block == full array dims (any B legal)
    return tb


def contrastive_loss(x1, x2, label, margin=1.0):
    B, D = x1.shape
    label2d = label.reshape(B, 1).astype(jnp.float32)
    itemsize = jnp.dtype(x1.dtype).itemsize

    tile_budget, vmem_limit = _vmem_budget()
    num_cores = _NUM_CORES
    tb = _choose_tile(B, D, itemsize, tile_budget, num_cores)

    num_tiles = -(-B // tb)
    tiles_per_core = -(-num_tiles // num_cores)
    last_tile = num_tiles - 1

    # Clamp the block index so grid points past the last real tile re-read a
    # valid block (their rows are fully masked in-kernel), never DMA out of bounds.
    def in_map(c, t):
        return (jnp.minimum(c * tiles_per_core + t, last_tile), 0)

    kernel = functools.partial(
        _contrastive_loss_kernel,
        margin=float(margin), batch=B,
        tiles_per_core=tiles_per_core, tile_rows=tb)

    cost = pl.CostEstimate(
        flops=6 * B * D,
        transcendentals=B,
        bytes_accessed=2 * B * D * itemsize + B * 4 + num_cores * 8 * 128 * 4,
    )

    partials = pl.pallas_call(
        kernel,
        out_shape=jax.ShapeDtypeStruct((num_cores, 8, 128), jnp.float32),
        grid_spec=pltpu.PrefetchScalarGridSpec(
            num_scalar_prefetch=0,
            grid=(num_cores, tiles_per_core),
            in_specs=[
                pl.BlockSpec((tb, D), in_map),
                pl.BlockSpec((tb, D), in_map),
                pl.BlockSpec((tb, 1), in_map),
            ],
            out_specs=pl.BlockSpec((1, 8, 128), lambda c, t: (c, 0, 0)),
        ),
        compiler_params=pltpu.CompilerParams(
            dimension_semantics=(pltpu.PARALLEL, pltpu.ARBITRARY),
            vmem_limit_bytes=vmem_limit,
        ),
        cost_estimate=cost,
    )(x1, x2, label2d)

    # Per-core partial sums -> mean over the true batch size.
    return jnp.sum(partials[:, 0, 0]) * (1.0 / B)


def contrastive_loss_ref(x1, x2, label, margin=1.0):
    # Pure-JAX reference for sanity checking.
    x1f = x1.astype(jnp.float32)
    x2f = x2.astype(jnp.float32)
    d = jnp.sqrt(jnp.sum((x1f - x2f + PAIRWISE_EPS) ** 2, axis=-1))
    loss = label * d**2 + (1.0 - label) * jnp.maximum(margin - d, 0.0) ** 2
    return jnp.mean(loss)


if __name__ == "__main__":
    key = jax.random.PRNGKey(0)
    k1, k2, k3, k4, k5, k6 = jax.random.split(key, 6)

    # Small test consistent with the module's forward (pairs of feature vectors).
    B, D = 8, 32
    x1 = jax.random.normal(k1, (B, D), dtype=jnp.float32)
    x2 = jax.random.normal(k2, (B, D), dtype=jnp.float32)
    label = jax.random.bernoulli(k3, 0.5, (B,)).astype(jnp.float32)

    loss = contrastive_loss(x1, x2, label)
    jax.block_until_ready(loss)
    ref = contrastive_loss_ref(x1, x2, label)
    assert jnp.allclose(loss, ref, rtol=1e-5, atol=1e-5), (loss, ref)

    # Larger bf16 test exercising the 2-core split + tail handling
    # (B=2000 -> tb=1000 per core, one tile each).
    B2, D2 = 2000, 128
    x1b = jax.random.normal(k4, (B2, D2), dtype=jnp.bfloat16)
    x2b = jax.random.normal(k5, (B2, D2), dtype=jnp.bfloat16)
    labelb = jax.random.bernoulli(k6, 0.5, (B2,)).astype(jnp.float32)

    loss_b = contrastive_loss(x1b, x2b, labelb)
    jax.block_until_ready(loss_b)
    ref_b = contrastive_loss_ref(x1b, x2b, labelb)
    assert jnp.allclose(loss_b, ref_b, rtol=1e-4, atol=1e-4), (loss_b, ref_b)

    print("KERNEL_OK")
</pallas_src>

<mosaic_0001>
module attributes {stable_mosaic.version = 11 : i64} {
  func.func @_contrastive_loss_kernel(%arg0: i32, %arg1: i32, %arg2: memref<8x32xf32, #tpu.memory_space<vmem>>, %arg3: memref<8x32xf32, #tpu.memory_space<vmem>>, %arg4: memref<8x1xf32, #tpu.memory_space<vmem>>, %arg5: memref<1x8x128xf32, #tpu.memory_space<vmem>>) attributes {dimension_semantics = [#tpu.dimension_semantics<parallel>, #tpu.dimension_semantics<arbitrary>], iteration_bounds = array<i64: 2, 1>, scalar_prefetch = 0 : i64, scratch_operands = 0 : i64, tpu.core_type = #tpu.core_type<tc>, window_params = [{transform_indices = @transform_0, window_bounds = array<i64: 8, 32>}, {transform_indices = @transform_1, window_bounds = array<i64: 8, 32>}, {transform_indices = @transform_2, window_bounds = array<i64: 8, 1>}, {transform_indices = @transform_3, window_bounds = array<i64: 1, 8, 128>}]} {
    %c0_i32 = arith.constant 0 : i32
    %0 = arith.cmpi eq, %arg1, %c0_i32 : i32
    %1 = arith.extui %0 : i1 to i32
    %c0_i32_0 = arith.constant 0 : i32
    %2 = arith.cmpi ne, %1, %c0_i32_0 : i32
    scf.if %2 {
      %cst_19 = arith.constant 0.000000e+00 : f32
      %42 = vector.broadcast %cst_19 : f32 to vector<1x8x128xf32>
      %c0_20 = arith.constant 0 : index
      %c0_21 = arith.constant 0 : index
      %c0_22 = arith.constant 0 : index
      %43 = vector.load %arg5[%c0_20, %c0_21, %c0_22] : memref<1x8x128xf32, #tpu.memory_space<vmem>>, vector<1x8x128xf32>
      tpu.vector_store %arg5[%c0_20, %c0_21, %c0_22], %42 {strides = array<i32>} : memref<1x8x128xf32, #tpu.memory_space<vmem>>, vector<1x8x128xf32>,
    } else {
    }
    %c0 = arith.constant 0 : index
    %c0_1 = arith.constant 0 : index
    %3 = vector.load %arg2[%c0, %c0_1] : memref<8x32xf32, #tpu.memory_space<vmem>>, vector<8x32xf32>
    %c0_2 = arith.constant 0 : index
    %c0_3 = arith.constant 0 : index
    %4 = vector.load %arg3[%c0_2, %c0_3] : memref<8x32xf32, #tpu.memory_space<vmem>>, vector<8x32xf32>
    %5 = arith.subf %3, %4 : vector<8x32xf32>
    %cst = arith.constant 9.99999997E-7 : f32
    %6 = vector.broadcast %cst : f32 to vector<8x32xf32>
    %7 = arith.addf %5, %6 : vector<8x32xf32>
    %8 = arith.mulf %7, %7 : vector<8x32xf32>
    %cst_4 = arith.constant dense<0.000000e+00> : vector<8xf32>
    %9 = vector.multi_reduction <add>, %8, %cst_4 [1] : vector<8x32xf32> to vector<8xf32>
    %10 = vector.shape_cast %9 : vector<8xf32> to vector<8x1xf32>
    %11 = math.sqrt %10 : vector<8x1xf32>
    %12 = arith.mulf %11, %11 : vector<8x1xf32>
    %c0_5 = arith.constant 0 : index
    %c0_6 = arith.constant 0 : index
    %13 = vector.load %arg4[%c0_5, %c0_6] : memref<8x1xf32, #tpu.memory_space<vmem>>, vector<8x1xf32>
    %cst_7 = arith.constant 1.000000e+00 : f32
    %14 = vector.broadcast %cst_7 : f32 to vector<8x1xf32>
    %15 = arith.subf %14, %11 : vector<8x1xf32>
    %cst_8 = arith.constant 0.000000e+00 : f32
    %16 = vector.broadcast %cst_8 : f32 to vector<8x1xf32>
    %17 = arith.maximumf %15, %16 : vector<8x1xf32>
    %18 = arith.mulf %13, %12 : vector<8x1xf32>
    %cst_9 = arith.constant 1.000000e+00 : f32
    %19 = vector.broadcast %cst_9 : f32 to vector<8x1xf32>
    %20 = arith.subf %19, %13 : vector<8x1xf32>
    %21 = arith.mulf %20, %17 : vector<8x1xf32>
    %22 = arith.mulf %21, %17 : vector<8x1xf32>
    %23 = arith.addf %18, %22 : vector<8x1xf32>
    %c1_i32 = arith.constant 1 : i32
    %24 = arith.muli %arg0, %c1_i32 : i32
    %25 = arith.addi %24, %arg1 : i32
    %26 = tpu.iota {dimensions = array<i32: 0>} : vector<8x1xi32>
    %c8_i32 = arith.constant 8 : i32
    %27 = arith.muli %25, %c8_i32 : i32
    %28 = vector.broadcast %27 : i32 to vector<8x1xi32>
    %29 = arith.addi %26, %28 : vector<8x1xi32>
    %c8_i32_10 = arith.constant 8 : i32
    %30 = vector.broadcast %c8_i32_10 : i32 to vector<8x1xi32>
    %31 = arith.cmpi slt, %29, %30 : vector<8x1xi32>
    %cst_11 = arith.constant 0.000000e+00 : f32
    %32 = vector.broadcast %cst_11 : f32 to vector<8x1xf32>
    %33 = arith.select %31, %23, %32 : vector<8x1xi1>, vector<8x1xf32>
    %c0_12 = arith.constant 0 : index
    %c0_13 = arith.constant 0 : index
    %c0_14 = arith.constant 0 : index
    %34 = vector.load %arg5[%c0_12, %c0_13, %c0_14] : memref<1x8x128xf32, #tpu.memory_space<vmem>>, vector<1x8x128xf32>
    %35 = vector.shape_cast %33 : vector<8x1xf32> to vector<1x8x1xf32>
    %cst_15 = arith.constant dense<0.000000e+00> : vector<1xf32>
    %36 = vector.multi_reduction <add>, %35, %cst_15 [1, 2] : vector<1x8x1xf32> to vector<1xf32>
    %37 = vector.shape_cast %36 : vector<1xf32> to vector<1x1x1xf32>
    %38 = vector.extract %37[0, 0, 0] : f32 from vector<1x1x1xf32>
    %39 = vector.broadcast %38 : f32 to vector<1x8x128xf32>
    %40 = arith.addf %34, %39 : vector<1x8x128xf32>
    %c0_16 = arith.constant 0 : index
    %c0_17 = arith.constant 0 : index
    %c0_18 = arith.constant 0 : index
    %41 = vector.load %arg5[%c0_16, %c0_17, %c0_18] : memref<1x8x128xf32, #tpu.memory_space<vmem>>, vector<1x8x128xf32>
    tpu.vector_store %arg5[%c0_16, %c0_17, %c0_18], %40 {strides = array<i32>} : memref<1x8x128xf32, #tpu.memory_space<vmem>>, vector<1x8x128xf32>,
    return
  }
  func.func @transform_0(%arg0: i32, %arg1: i32) -> (i32, i32) {
    %c1_i32 = arith.constant 1 : i32
    %0 = arith.muli %arg0, %c1_i32 : i32
    %1 = arith.addi %0, %arg1 : i32
    %c0_i32 = arith.constant 0 : i32
    %2 = arith.minsi %1, %c0_i32 : i32
    %c0_i32_0 = arith.constant 0 : i32
    %c0_i32_1 = arith.constant 0 : i32
    return %2, %c0_i32_0 : i32, i32
  }
  func.func @transform_1(%arg0: i32, %arg1: i32) -> (i32, i32) {
    %c1_i32 = arith.constant 1 : i32
    %0 = arith.muli %arg0, %c1_i32 : i32
    %1 = arith.addi %0, %arg1 : i32
    %c0_i32 = arith.constant 0 : i32
    %2 = arith.minsi %1, %c0_i32 : i32
    %c0_i32_0 = arith.constant 0 : i32
    %c0_i32_1 = arith.constant 0 : i32
    return %2, %c0_i32_0 : i32, i32
  }
  func.func @transform_2(%arg0: i32, %arg1: i32) -> (i32, i32) {
    %c1_i32 = arith.constant 1 : i32
    %0 = arith.muli %arg0, %c1_i32 : i32
    %1 = arith.addi %0, %arg1 : i32
    %c0_i32 = arith.constant 0 : i32
    %2 = arith.minsi %1, %c0_i32 : i32
    %c0_i32_0 = arith.constant 0 : i32
    %c0_i32_1 = arith.constant 0 : i32
    return %2, %c0_i32_0 : i32, i32
  }
  func.func @transform_3(%arg0: i32, %arg1: i32) -> (i32, i32, i32) {
    %c0_i32 = arith.constant 0 : i32
    %c0_i32_0 = arith.constant 0 : i32
    %c0_i32_1 = arith.constant 0 : i32
    return %arg0, %c0_i32, %c0_i32_0 : i32, i32, i32
  }
}

</mosaic_0001>

<llo_original>
// kernel: tpu_custom_call.1
$region0: #{tpu_custom_call.1}
  #allocation0 [shape = 'u32[]', space=smem, size = 0x4, offset = 0x4, fixed_abs, tag = 'smem constant byte address 0x4 - core index']
  #allocation1 [shape = 'u32[144,128]{1,0:T(1,128)}', space=vmem, size = 0x12000, scoped, tag = 'internal scratch']
  %s0 = inlined_call_operand.vmem [shape: f32[8,32], index: 0, kind: input, shape index: {}]
  %s1 = inlined_call_operand.hbm [shape: f32[8,32], index: 1, kind: input, shape index: {}]
  %s2 = inlined_call_operand.vmem [shape: f32[8,1], index: 2, kind: input, shape index: {}]
  %s3 = inlined_call_operand.hbm [shape: f32[2,8,128], index: 3, kind: output, shape index: {}]
  %s4 = sld [smem:[#allocation0]]
  $region53: #{tpu_custom_call.1} parent=0
    _
  %s6 = ssub.s32 1, %s4
  %s7 = scalar_select 0, %s6, %s4
  $region1: #{tpu_custom_call.1} parent=0
    #allocation2 [shape = 'u8[8192]{0}', space=vmem, size = 0x2000, scoped, tag = 'input window, operand 1']
    #allocation3 [shape = 's32[2]{0}', space=sflag, size = 0x8, scoped, tag = 'scoped memory for tpu_custom_call.1']
    #allocation4 [shape = 's32[2]{0}', space=sflag, size = 0x8, scoped, tag = 'scoped memory for tpu_custom_call.1']
    #allocation5 [shape = 'u8[8192]{0}', space=vmem, size = 0x2000, scoped, tag = 'output window, operand 0']
    %8 = vsyncpa [#allocation3], 0
    %s9 = scalar_lea.sflag [#allocation3], 1
    %10 = vsyncpa %s9, 0
    %11 = vsyncpa [#allocation4], 0
    %s12 = scalar_lea.sflag [#allocation4], 1
    %13 = vsyncpa %s12, 0
    loop: start=0, step=1, limit=4
    $region2: #{tpu_custom_call.1} parent=1 // loop_pre_header
      _
    $region3: #{tpu_custom_call.1} parent=1 // loop_header
      %s15 = sphi 0, %s19
      %p16 = scmp.ge.s32.totalorder %s15, 4
      %s22 = sphi 0, %s34
      %s23 = sphi 0, %s30
      %s24 = sphi 0, %s22
      %s25 = sphi 0, %s23
      %s26 = sphi 0, %s24
      %s27 = sphi 0, %s25
      %s43 = sphi 0, %s45
      %s46 = sphi 0, %s43
      %s47 = sphi 0, %s46
      %s63 = sphi 0, %s47
      %s75 = sphi 0, %s77
      %s78 = sphi 0, %s75
      %s79 = sphi 0, %s78
      %s95 = sphi 0, %s79
      %s107 = sphi 0, %s109
      %s110 = sphi 0, %s107
      %s111 = sphi 0, %s110
      %s127 = sphi 0, %s111
      %s133 = sphi 0, %s135
      %s136 = sphi 0, %s133
      %s137 = sphi 0, %s136
      %s153 = sphi 0, %s137
    $region4: #{tpu_custom_call.1} parent=1 // loop_header_branch
      %18 = sbr.rel (%p16) target = $region8
    $region5: #{tpu_custom_call.1} parent=1 // loop_body
      %s20 = ssub.s32 %s15, 1
      %s21 = ssub.s32 %s15, 2
      %s28 = sadd.s32 1, %s23
      %p29 = scmp.ge.s32.totalorder %s28, 1
      %s30 = scalar_select %p29, 0, %s28
      %s31 = sadd.s32 1, %s22
      %s32 = scalar_select %p29, %s31, %s22
      %p33 = scmp.ge.s32.totalorder %s32, 2
      %s34 = scalar_select %p33, 0, %s32
      %s35 = sadd.s32 %s22, %s23
      %p36 = scmp.lt.s32.totalorder %s35, 0
      %s37 = scalar_select %p36, %s35, 0
      %s38 = sadd.s32 %s34, %s30
      %p39 = scmp.lt.s32.totalorder %s38, 0
      %s40 = scalar_select %p39, %s38, 0
      %s41 = ssub.s32 %s37, %s40
      %p42 = scmp.eq.s32.totalorder %s41, 0
      %s44 = sadd.s32 %s43, 1
      %s45 = scalar_select %p42, %s43, %s44
      %p48 = pneg %p42
      %p49 = scmp.eq.s32.totalorder %s15, 1
      %p50 = por %p48, %p49
      %p51 = scmp.ne.s32.totalorder %s43, %s46
      %p52 = scmp.eq.s32.totalorder %s15, 0
      %p53 = por %p51, %p52
      %p54 = scmp.ne.s32.totalorder %s43, %s46
      %p55 = scmp.eq.s32.totalorder %s20, 1
      %p56 = por %p54, %p55
      %p57 = scmp.ne.s32.totalorder %s46, %s47
      %p58 = scmp.eq.s32.totalorder %s20, 0
      %p59 = por %p57, %p58
      %p60 = scmp.ne.s32.totalorder %s46, %s47
      %p61 = scmp.eq.s32.totalorder %s21, 1
      %p62 = por %p60, %p61
      %p64 = scmp.ne.s32.totalorder %s47, %s63
      %p65 = scmp.eq.s32.totalorder %s21, 0
      %p66 = por %p64, %p65
      %s67 = sadd.s32 %s22, %s23
      %p68 = scmp.lt.s32.totalorder %s67, 0
      %s69 = scalar_select %p68, %s67, 0
      %s70 = sadd.s32 %s34, %s30
      %p71 = scmp.lt.s32.totalorder %s70, 0
      %s72 = scalar_select %p71, %s70, 0
      %s73 = ssub.s32 %s69, %s72
      %p74 = scmp.eq.s32.totalorder %s73, 0
      %s76 = sadd.s32 %s75, 1
      %s77 = scalar_select %p74, %s75, %s76
      %p80 = pneg %p74
      %p81 = scmp.eq.s32.totalorder %s15, 1
      %p82 = por %p80, %p81
      %p83 = scmp.ne.s32.totalorder %s75, %s78
      %p84 = scmp.eq.s32.totalorder %s15, 0
      %p85 = por %p83, %p84
      %p86 = scmp.ne.s32.totalorder %s75, %s78
      %p87 = scmp.eq.s32.totalorder %s20, 1
      %p88 = por %p86, %p87
      %p89 = scmp.ne.s32.totalorder %s78, %s79
      %p90 = scmp.eq.s32.totalorder %s20, 0
      %p91 = por %p89, %p90
      %p92 = scmp.ne.s32.totalorder %s78, %s79
      %p93 = scmp.eq.s32.totalorder %s21, 1
      %p94 = por %p92, %p93
      %p96 = scmp.ne.s32.totalorder %s79, %s95
      %p97 = scmp.eq.s32.totalorder %s21, 0
      %p98 = por %p96, %p97
      %s99 = sadd.s32 %s22, %s23
      %p100 = scmp.lt.s32.totalorder %s99, 0
      %s101 = scalar_select %p100, %s99, 0
      %s102 = sadd.s32 %s34, %s30
      %p103 = scmp.lt.s32.totalorder %s102, 0
      %s104 = scalar_select %p103, %s102, 0
      %s105 = ssub.s32 %s101, %s104
      %p106 = scmp.eq.s32.totalorder %s105, 0
      %s108 = sadd.s32 %s107, 1
      %s109 = scalar_select %p106, %s107, %s108
      %p112 = pneg %p106
      %p113 = scmp.eq.s32.totalorder %s15, 1
      %p114 = por %p112, %p113
      %p115 = scmp.ne.s32.totalorder %s107, %s110
      %p116 = scmp.eq.s32.totalorder %s15, 0
      %p117 = por %p115, %p116
      %p118 = scmp.ne.s32.totalorder %s107, %s110
      %p119 = scmp.eq.s32.totalorder %s20, 1
      %p120 = por %p118, %p119
      %p121 = scmp.ne.s32.totalorder %s110, %s111
      %p122 = scmp.eq.s32.totalorder %s20, 0
      %p123 = por %p121, %p122
      %p124 = scmp.ne.s32.totalorder %s110, %s111
      %p125 = scmp.eq.s32.totalorder %s21, 1
      %p126 = por %p124, %p125
      %p128 = scmp.ne.s32.totalorder %s111, %s127
      %p129 = scmp.eq.s32.totalorder %s21, 0
      %p130 = por %p128, %p129
      %s131 = ssub.s32 %s22, %s34
      %p132 = scmp.eq.s32.totalorder %s131, 0
      %s134 = sadd.s32 %s133, 1
      %s135 = scalar_select %p132, %s133, %s134
      %p138 = pneg %p132
      %p139 = scmp.eq.s32.totalorder %s15, 1
      %p140 = por %p138, %p139
      %p141 = scmp.ne.s32.totalorder %s133, %s136
      %p142 = scmp.eq.s32.totalorder %s15, 0
      %p143 = por %p141, %p142
      %p144 = scmp.ne.s32.totalorder %s133, %s136
      %p145 = scmp.eq.s32.totalorder %s20, 1
      %p146 = por %p144, %p145
      %p147 = scmp.ne.s32.totalorder %s136, %s137
      %p148 = scmp.eq.s32.totalorder %s20, 0
      %p149 = por %p147, %p148
      %p150 = scmp.ne.s32.totalorder %s136, %s137
      %p151 = scmp.eq.s32.totalorder %s21, 1
      %p152 = por %p150, %p151
      %p154 = scmp.ne.s32.totalorder %s137, %s153
      %p155 = scmp.eq.s32.totalorder %s21, 0
      %p156 = por %p154, %p155
      %p157 = scmp.le.s32.totalorder 1, %s15
      %p158 = scmp.lt.s32.totalorder %s15, 3
      %p159 = pnand %p157, %p158
      %p160 = pneg %p159
      // Predicated region
      $region9: #{tpu_custom_call.1} parent=5 // pred_check
        _
      $region10: #{tpu_custom_call.1} parent=5 // pred_check_branch
        %162 = sbr.rel (%p159) target = $region12
      $region11: #{tpu_custom_call.1} parent=5 // pred_region
        %s163 = ssub.s32 %s15, 1
      $region12: #{tpu_custom_call.1} parent=5 // pred_fallthru
        _
      %p164 = scmp.lt.s32.totalorder %s15, 2
      // Predicated region
      $region13: #{tpu_custom_call.1} parent=5 // pred_check
        %p165 = pneg %p164
      $region14: #{tpu_custom_call.1} parent=5 // pred_check_branch
        %167 = sbr.rel (%p165) target = $region16
      $region15: #{tpu_custom_call.1} parent=5 // pred_region
        // Predicated region
        $region17: #{tpu_custom_call.1} parent=15 // pred_check
          %p168 = pneg %p53
        $region18: #{tpu_custom_call.1} parent=15 // pred_check_branch
          %170 = sbr.rel (%p168) target = $region20
        $region19: #{tpu_custom_call.1} parent=15 // pred_region
          %s171 = sadd.s32 %s22, %s23
          %p172 = scmp.lt.s32.totalorder %s171, 0
          %s173 = scalar_select %p172, %s171, 0
          %p174 = scmp.lt.s32.totalorder %s173, 0
          %s175 = scalar_select %p174, %s173, 0
          %s176 = smul.addr %s175, 8
          %s177 = scalar_lea.vmem %s0, %s176
          %s178 = sadd.s32 %s22, %s23
          %p179 = scmp.lt.s32.totalorder %s178, 0
          %s180 = scalar_select %p179, %s178, 0
        $region20: #{tpu_custom_call.1} parent=15 // pred_fallthru
          _
        // Predicated region
        $region21: #{tpu_custom_call.1} parent=15 // pred_check
          %p181 = pneg %p85
        $region22: #{tpu_custom_call.1} parent=15 // pred_check_branch
          %183 = sbr.rel (%p181) target = $region24
        $region23: #{tpu_custom_call.1} parent=15 // pred_region
          %s184 = sand.u32 %s75, 1
          %s185 = scalar_lea.sflag [#allocation3], %s184
          %s186 = sand.u32 %s75, 1
          %s187 = smul.addr %s186, 8
          %s188 = scalar_lea.vmem [#allocation2], %s187
          %s189 = sadd.s32 %s22, %s23
          %p190 = scmp.lt.s32.totalorder %s189, 0
          %s191 = scalar_select %p190, %s189, 0
          %s193 = ssub.s32 128, 128
          %194 = vsyncadd %s185, %s193
          %s195 = smul.addr %s191, 128
          %s196 = scalar_lea.hbm %s1, %s195
          %s198 = sshll.u32 %s188, 4
          %s199 = int_to_ptr.vmem [resolvable:$true] %s198
          %201 = dma.hbm_to_vmem [thread:$0]  %s196, 128, %s199, %s185
        $region24: #{tpu_custom_call.1} parent=15 // pred_fallthru
          _
        // Predicated region
        $region25: #{tpu_custom_call.1} parent=15 // pred_check
          %p202 = pneg %p117
        $region26: #{tpu_custom_call.1} parent=15 // pred_check_branch
          %204 = sbr.rel (%p202) target = $region28
        $region27: #{tpu_custom_call.1} parent=15 // pred_region
          %s205 = sadd.s32 %s22, %s23
          %p206 = scmp.lt.s32.totalorder %s205, 0
          %s207 = scalar_select %p206, %s205, 0
          %p208 = scmp.lt.s32.totalorder %s207, 0
          %s209 = scalar_select %p208, %s207, 0
          %s210 = smul.addr %s209, 8
          %s211 = scalar_lea.vmem %s2, %s210
          %s212 = sadd.s32 %s22, %s23
          %p213 = scmp.lt.s32.totalorder %s212, 0
          %s214 = scalar_select %p213, %s212, 0
        $region28: #{tpu_custom_call.1} parent=15 // pred_fallthru
          _
      $region16: #{tpu_custom_call.1} parent=5 // pred_fallthru
        _
      %p215 = scmp.le.s32.totalorder 1, %s15
      %p216 = scmp.lt.s32.totalorder %s15, 3
      %p217 = pnand %p215, %p216
      %p218 = pneg %p217
      // Predicated region
      $region29: #{tpu_custom_call.1} parent=5 // pred_check
        _
      $region30: #{tpu_custom_call.1} parent=5 // pred_check_branch
        %220 = sbr.rel (%p217) target = $region32
      $region31: #{tpu_custom_call.1} parent=5 // pred_region
        %s221 = ssub.s32 %s15, 1
        %s222 = sand.u32 %s78, 1
        %s223 = scalar_lea.sflag [#allocation3], %s222
        %s224 = sand.u32 %s78, 1
        %s225 = smul.addr %s224, 8
        %s226 = scalar_lea.vmem [#allocation2], %s225
        // Predicated region
        $region33: #{tpu_custom_call.1} parent=31 // pred_check
          %p227 = pneg %p91
        $region34: #{tpu_custom_call.1} parent=31 // pred_check_branch
          %229 = sbr.rel (%p227) target = $region36
        $region35: #{tpu_custom_call.1} parent=31 // pred_region
          %230 = dma.done %s223, 128
        $region36: #{tpu_custom_call.1} parent=31 // pred_fallthru
          _
        %s231 = sadd.s32 %s24, %s25
        %p232 = scmp.lt.s32.totalorder %s231, 0
        %s233 = scalar_select %p232, %s231, 0
        %p234 = scmp.lt.s32.totalorder %s233, 0
        %s235 = scalar_select %p234, %s233, 0
        %s236 = smul.addr %s235, 8
        %s237 = scalar_lea.vmem %s0, %s236
        %p238 = pneg %p59
        %p239 = pneg %p56
        %s240 = sand.u32 %s78, 1
        %s241 = scalar_lea.sflag [#allocation3], %s240
        %s242 = sand.u32 %s78, 1
        %s243 = smul.addr %s242, 8
        %s244 = scalar_lea.vmem [#allocation2], %s243
        %p245 = pneg %p91
        %p246 = pneg %p88
        %s247 = sadd.s32 %s24, %s25
        %p248 = scmp.lt.s32.totalorder %s247, 0
        %s249 = scalar_select %p248, %s247, 0
        %p250 = scmp.lt.s32.totalorder %s249, 0
        %s251 = scalar_select %p250, %s249, 0
        %s252 = smul.addr %s251, 8
        %s253 = scalar_lea.vmem %s2, %s252
        %p254 = pneg %p123
        %p255 = pneg %p120
        %p256 = pneg %p149
        %p257 = pneg %p146
        %s258 = sand.u32 %s136, 1
        %s259 = scalar_lea.sflag [#allocation4], %s258
        %s260 = sand.u32 %s136, 1
        %s261 = smul.addr %s260, 8
        %s262 = scalar_lea.vmem [#allocation5], %s261
        %s263 = sadd.s32 %s24, %s25
        %p264 = scmp.lt.s32.totalorder %s263, 0
        %s265 = scalar_select %p264, %s263, 0
        %p266 = scmp.lt.s32.totalorder %s265, 0
        %s267 = scalar_select %p266, %s265, 0
        %s268 = smul.addr %s267, 8
        %s269 = scalar_lea.vmem %s0, %s268
        %s270 = sadd.s32 %s24, %s25
        %p271 = scmp.lt.s32.totalorder %s270, 0
        %s272 = scalar_select %p271, %s270, 0
        %s273 = sadd.s32 %s24, %s25
        %p274 = scmp.lt.s32.totalorder %s273, 0
        %s275 = scalar_select %p274, %s273, 0
        %s276 = sadd.s32 %s24, %s25
        %p277 = scmp.lt.s32.totalorder %s276, 0
        %s278 = scalar_select %p277, %s276, 0
        %p279 = scmp.lt.s32.totalorder %s278, 0
        %s280 = scalar_select %p279, %s278, 0
        %s281 = smul.addr %s280, 8
        %s282 = scalar_lea.vmem %s2, %s281
        %s283 = sadd.s32 %s24, %s25
        %p284 = scmp.lt.s32.totalorder %s283, 0
        %s285 = scalar_select %p284, %s283, 0
        %p286 = scmp.eq.s32.totalorder %s25, 0
        // Predicated region
        $region37: #{tpu_custom_call.1} parent=31 // pred_check
          %p287 = pneg %p286
        $region38: #{tpu_custom_call.1} parent=31 // pred_check_branch
          %289 = sbr.rel (%p287) target = $region40
        $region39: #{tpu_custom_call.1} parent=31 // pred_region
          %290 = vst [vmem:[%s262] sm:$0xff] 0.0
        $region40: #{tpu_custom_call.1} parent=31 // pred_fallthru
          _
        %v291 = vld [vmem:[%s269] sm:$0xff]
        %v292 = vld [vmem:[%s226] sm:$0xff]
        %v293 = vsub.f32 %v291, %v292
        %v294 = vadd.f32 %v293, 1e-06
        %v295 = vmul.f32 %v294, %v294
        %vm296 = vcmask 261120
        %v297 = vsel %vm296, %v295, 0.0
        %298 = vadd.xlane.f32.xlu0 %v297
        %v299 = vpop.xlane.xlu0 %298
        %v300 = vrsqrt.pop %v299
        %v301 = vmul.f32 %v299, %v300
        %vm302 = vcmp.eq.f32.partialorder %v299, inf
        %v303 = vsel %vm302, %v299, %v301
        %vm304 = vcmp.eq.f32.partialorder %v299, 0.0
        %v305 = vand.u32 %v299, 2147483648
        %v306 = vsel %vm304, %v305, %v303
        %v307 = vmul.f32 %v306, %v306
        %v308 = vld [vmem:[%s282] sm:$0xff]
        %v309 = vsub.f32 1.0, %v306
        %v310 = vmax.f32 %v309, 0.0
        %v311 = vmul.f32 %v308, %v307
        %v312 = vsub.f32 1.0, %v308
        %v313 = vmul.f32 %v312, %v310
        %v314 = vmul.f32 %v313, %v310
        %v315 = vadd.f32 %v311, %v314
        %s316 = sadd.s32 %s24, %s25
        %v317 = vlaneseq
        %v318 = vshrl.u32 %v317, 7
        %s319 = smul.u32 %s316, 8
        %v320 = vstv %s319
        %v321 = vadd.s32 %v318, %v320
        %vm322 = vcmp.lt.s32.totalorder %v321, 8
        %v323 = vsel %vm322, %v315, 0.0
        %v324 = vld [vmem:[%s262] sm:$0xff]
        %vm325 = vcmask 7168
        %v326 = vsel %vm325, %v323, 0.0
        %327 = vadd.xlane.f32.xlu0 %v326
        %v328 = vpop.xlane.xlu0 %327
        %v329 = vrot.slane %v328, 4
        %v330 = vadd.f32 %v328, %v329
        %v331 = vrot.slane %v330, 2
        %v332 = vadd.f32 %v330, %v331
        %v333 = vrot.slane %v332, 1
        %v334 = vadd.f32 %v332, %v333
        %s335 = vtos %v334
        %v336 = vstv %s335
        %v337 = vadd.f32 %v324, %v336
        %338 = vst [vmem:[%s262] sm:$0xff] %v337
        %s339 = sand.u32 %s136, 1
        %s340 = scalar_lea.sflag [#allocation4], %s339
        %s341 = sand.u32 %s136, 1
        %s342 = smul.addr %s341, 8
        %s343 = scalar_lea.vmem [#allocation5], %s342
        // Predicated region
        $region41: #{tpu_custom_call.1} parent=31 // pred_check
          %p344 = pneg %p146
        $region42: #{tpu_custom_call.1} parent=31 // pred_check_branch
          %346 = sbr.rel (%p344) target = $region44
        $region43: #{tpu_custom_call.1} parent=31 // pred_region
          %s348 = ssub.s32 128, 128
          %349 = vsyncadd %s340, %s348
          %s350 = smul.addr %s24, 128
          %s351 = scalar_lea.hbm %s3, %s350
          %s353 = sshll.u32 %s343, 4
          %s354 = int_to_ptr.vmem [resolvable:$true] %s353
          %356 = dma.vmem_to_hbm [thread:$0]  %s354, 128, %s351, %s340
        $region44: #{tpu_custom_call.1} parent=31 // pred_fallthru
          _
      $region32: #{tpu_custom_call.1} parent=5 // pred_fallthru
        _
      %p357 = scmp.le.s32.totalorder 2, %s15
      // Predicated region
      $region45: #{tpu_custom_call.1} parent=5 // pred_check
        %p358 = pneg %p357
      $region46: #{tpu_custom_call.1} parent=5 // pred_check_branch
        %360 = sbr.rel (%p358) target = $region48
      $region47: #{tpu_custom_call.1} parent=5 // pred_region
        %s361 = ssub.s32 %s15, 2
        // Predicated region
        $region49: #{tpu_custom_call.1} parent=47 // pred_check
          %p362 = pneg %p152
        $region50: #{tpu_custom_call.1} parent=47 // pred_check_branch
          %364 = sbr.rel (%p362) target = $region52
        $region51: #{tpu_custom_call.1} parent=47 // pred_region
          %s365 = sand.u32 %s137, 1
          %s366 = scalar_lea.sflag [#allocation4], %s365
          %s367 = sand.u32 %s137, 1
          %s368 = smul.addr %s367, 8
          %s369 = scalar_lea.vmem [#allocation5], %s368
          %370 = dma.done %s366, 128
        $region52: #{tpu_custom_call.1} parent=47 // pred_fallthru
          _
      $region48: #{tpu_custom_call.1} parent=5 // pred_fallthru
        _
    $region6: #{tpu_custom_call.1} parent=1 // loop_footer
      %s19 = sadd.s32 1, %s15
    $region7: #{tpu_custom_call.1} parent=1 // loop_footer_branch
      %14 = sbr.rel target = $region3
    $region8: #{tpu_custom_call.1} parent=1 // loop_exit
      _
    %371 = vsyncpa [#allocation3], 1
    %s372 = scalar_lea.sflag [#allocation3], 1
    %373 = vsyncpa %s372, 1
    %374 = vsyncpa [#allocation4], 1
    %s375 = scalar_lea.sflag [#allocation4], 1
    %376 = vsyncpa %s375, 1

</llo_original>
